<compile_context>
chip_gen: v5e
topology: v5e:2x2
jax: 0.10.0
libtpu: 0.0.40
codegen_flags: <defaults>
</compile_context>

<pallas_src>
import jax
import jax.numpy as jnp
from jax.experimental import pallas as pl
from jax.experimental.pallas import tpu as pltpu

# --- CapsuleLoss / WeightedMarginLoss defaults ---
LOSS_LAMBDA = 0.5
FOCAL_GAMMA = 2.0          # realized below as an explicit square
RECON_SCALE = 5e-4
M_PLUS = 0.9
M_MINUS = 0.1


def _round_up(x, m):
    return (x + m - 1) // m * m


def capsule_loss(inputs, labels, images, reconstructions, masks,
                 *, tm_max=256, lanes_max=1024):
    """Pallas TPU implementation of CapsuleLoss.forward (size_average=False)."""
    n = images.size
    assert reconstructions.size == n and masks.size == n

    # Lane-dense slab geometry (lanes multiple of 128, rows multiple of 8).
    lanes = lanes_max if n >= lanes_max else _round_up(n, 128)
    n_pad = _round_up(n, lanes * 8)
    rows = n_pad // lanes
    tm = min(tm_max, rows)
    num_tiles = pl.cdiv(rows, tm)
    need_mask = (rows % tm) != 0            # partial last tile -> mask OOB rows

    def to_slab(x):
        flat = x.reshape(-1)
        if n_pad != n:
            flat = jnp.pad(flat, (0, n_pad - n))   # zeros contribute 0 to SSE
        return flat.reshape(rows, lanes)

    img2 = to_slab(images)
    rec2 = to_slab(reconstructions)
    msk2 = to_slab(masks)

    def kernel(inp_ref, lbl_ref, img_ref, rec_ref, msk_ref, out_ref, acc_ref):
        i = pl.program_id(0)

        @pl.when(i == 0)
        def _init():
            acc_ref[...] = jnp.zeros_like(acc_ref)

        # Streaming SSE accumulation (pure VPU work, in-tile f32 casts).
        diff = rec_ref[...].astype(jnp.float32) - (
            img_ref[...].astype(jnp.float32) * msk_ref[...].astype(jnp.float32))
        sq = diff * diff
        if need_mask:  # static: only emitted if the last tile is partial
            row = jax.lax.broadcasted_iota(jnp.int32, (tm, 1), 0) + i * tm
            sq = jnp.where(row < rows, sq, 0.0)
        acc_ref[...] += sq

        @pl.when(i == pl.num_programs(0) - 1)
        def _finalize():
            recon_sse = jnp.sum(acc_ref[...])

            # WeightedMarginLoss (size_average=False -> sum), focal gamma=2.
            x = inp_ref[...].astype(jnp.float32)
            y = lbl_ref[...].astype(jnp.float32)
            pos = jnp.maximum(M_PLUS - x, 0.0)
            neg = jnp.maximum(x - M_MINUS, 0.0)
            l_k = y * pos * pos + LOSS_LAMBDA * (1.0 - y) * neg * neg
            pt = x * y + (1.0 - x) * (1.0 - y)
            one_m_pt = 1.0 - pt
            l_k = l_k * (one_m_pt * one_m_pt)       # (1 - pt) ** 2
            margin = jnp.sum(l_k)

            out_ref[0, 0] = margin + jnp.float32(RECON_SCALE) * recon_sse

    b, k = inputs.shape
    big_spec = pl.BlockSpec((tm, lanes), lambda i: (i, 0))
    small_spec = pl.BlockSpec((b, k), lambda i: (0, 0))   # resident, no re-DMA

    out = pl.pallas_call(
        kernel,
        out_shape=jax.ShapeDtypeStruct((1, 1), jnp.float32),
        grid_spec=pltpu.PrefetchScalarGridSpec(
            num_scalar_prefetch=0,
            grid=(num_tiles,),
            in_specs=[small_spec, small_spec, big_spec, big_spec, big_spec],
            out_specs=pl.BlockSpec((1, 1), lambda i: (0, 0),
                                   memory_space=pltpu.MemorySpace.SMEM),
            scratch_shapes=[pltpu.VMEM((tm, lanes), jnp.float32)],
        ),
        compiler_params=pltpu.CompilerParams(
            dimension_semantics=("arbitrary",)),
    )(inputs, labels, img2, rec2, msk2)
    return out[0, 0]


def _reference_loss(inputs, labels, images, reconstructions, masks):
    """Pure-JAX reference mirroring the PyTorch CapsuleLoss semantics."""
    x = inputs.astype(jnp.float32)
    y = labels.astype(jnp.float32)
    l_k = (y * jnp.maximum(M_PLUS - x, 0.0) ** 2
           + LOSS_LAMBDA * (1.0 - y) * jnp.maximum(x - M_MINUS, 0.0) ** 2)
    pt = x * y + (1.0 - x) * (1.0 - y)
    l_k = l_k * (1.0 - pt) ** FOCAL_GAMMA
    margin = jnp.sum(l_k)
    recon = jnp.sum((reconstructions.astype(jnp.float32)
                     - images.astype(jnp.float32)
                     * masks.astype(jnp.float32)) ** 2)
    return margin + RECON_SCALE * recon


if __name__ == "__main__":
    key = jax.random.PRNGKey(0)
    k = jax.random.split(key, 5)

    B, NUM_CLASSES = 2, 4
    C, H, W = 1, 16, 16

    inputs = jax.random.uniform(k[0], (B, NUM_CLASSES), jnp.float32)       # capsule lengths
    labels = jax.nn.one_hot(
        jax.random.randint(k[1], (B,), 0, NUM_CLASSES), NUM_CLASSES, dtype=jnp.float32)
    images = jax.random.uniform(k[2], (B, C, H, W), jnp.float32)           # NCHW
    reconstructions = jax.random.uniform(k[3], (B, C, H, W), jnp.float32)  # NCHW
    masks = (jax.random.uniform(k[4], (B, C, H, W)) > 0.3).astype(jnp.int8)  # narrow stream

    loss = capsule_loss(inputs, labels, images, reconstructions, masks)
    loss = jax.block_until_ready(loss)

    ref = _reference_loss(inputs, labels, images, reconstructions, masks)
    assert jnp.allclose(loss, ref, rtol=1e-5, atol=1e-5), (loss, ref)

    print("KERNEL_OK")
</pallas_src>

<mosaic_0001>
module attributes {stable_mosaic.version = 11 : i64} {
  func.func @kernel(%arg0: i32, %arg1: memref<2x4xf32, #tpu.memory_space<vmem>>, %arg2: memref<2x4xf32, #tpu.memory_space<vmem>>, %arg3: memref<8x512xf32, #tpu.memory_space<vmem>>, %arg4: memref<8x512xf32, #tpu.memory_space<vmem>>, %arg5: memref<8x512xi8, #tpu.memory_space<vmem>>, %arg6: memref<1x1xf32, #tpu.memory_space<smem>>, %arg7: memref<8x512xf32, #tpu.memory_space<vmem>>) attributes {dimension_semantics = [#tpu.dimension_semantics<arbitrary>], iteration_bounds = array<i64: 1>, scalar_prefetch = 0 : i64, scratch_operands = 1 : i64, tpu.core_type = #tpu.core_type<tc>, window_params = [{pipeline_mode = #tpu.pipeline_mode<synchronous>, transform_indices = @transform_0, window_bounds = array<i64: 2, 4>}, {pipeline_mode = #tpu.pipeline_mode<synchronous>, transform_indices = @transform_1, window_bounds = array<i64: 2, 4>}, {transform_indices = @transform_2, window_bounds = array<i64: 8, 512>}, {transform_indices = @transform_3, window_bounds = array<i64: 8, 512>}, {transform_indices = @transform_4, window_bounds = array<i64: 8, 512>}, {transform_indices = @transform_5, window_bounds = array<i64: 1, 1>}]} {
    %c0_i32 = arith.constant 0 : i32
    %0 = arith.cmpi eq, %arg0, %c0_i32 : i32
    %1 = arith.extui %0 : i1 to i32
    %c0_i32_0 = arith.constant 0 : i32
    %2 = arith.cmpi ne, %1, %c0_i32_0 : i32
    scf.if %2 {
      %cst = arith.constant 0.000000e+00 : f32
      %16 = vector.broadcast %cst : f32 to vector<8x512xf32>
      %c0_12 = arith.constant 0 : index
      %c0_13 = arith.constant 0 : index
      %17 = vector.load %arg7[%c0_12, %c0_13] : memref<8x512xf32, #tpu.memory_space<vmem>>, vector<8x512xf32>
      tpu.vector_store %arg7[%c0_12, %c0_13], %16 {strides = array<i32>} : memref<8x512xf32, #tpu.memory_space<vmem>>, vector<8x512xf32>,
    } else {
    }
    %c0 = arith.constant 0 : index
    %c0_1 = arith.constant 0 : index
    %3 = vector.load %arg4[%c0, %c0_1] : memref<8x512xf32, #tpu.memory_space<vmem>>, vector<8x512xf32>
    %c0_2 = arith.constant 0 : index
    %c0_3 = arith.constant 0 : index
    %4 = vector.load %arg3[%c0_2, %c0_3] : memref<8x512xf32, #tpu.memory_space<vmem>>, vector<8x512xf32>
    %c0_4 = arith.constant 0 : index
    %c0_5 = arith.constant 0 : index
    %5 = vector.load %arg5[%c0_4, %c0_5] : memref<8x512xi8, #tpu.memory_space<vmem>>, vector<8x512xi8>
    %6 = arith.sitofp %5 : vector<8x512xi8> to vector<8x512xf32>
    %7 = arith.mulf %4, %6 : vector<8x512xf32>
    %8 = arith.subf %3, %7 : vector<8x512xf32>
    %9 = arith.mulf %8, %8 : vector<8x512xf32>
    %c0_6 = arith.constant 0 : index
    %c0_7 = arith.constant 0 : index
    %10 = vector.load %arg7[%c0_6, %c0_7] : memref<8x512xf32, #tpu.memory_space<vmem>>, vector<8x512xf32>
    %11 = arith.addf %10, %9 : vector<8x512xf32>
    %c0_8 = arith.constant 0 : index
    %c0_9 = arith.constant 0 : index
    %12 = vector.load %arg7[%c0_8, %c0_9] : memref<8x512xf32, #tpu.memory_space<vmem>>, vector<8x512xf32>
    tpu.vector_store %arg7[%c0_8, %c0_9], %11 {strides = array<i32>} : memref<8x512xf32, #tpu.memory_space<vmem>>, vector<8x512xf32>,
    %c0_i32_10 = arith.constant 0 : i32
    %13 = arith.cmpi eq, %arg0, %c0_i32_10 : i32
    %14 = arith.extui %13 : i1 to i32
    %c0_i32_11 = arith.constant 0 : i32
    %15 = arith.cmpi ne, %14, %c0_i32_11 : i32
    scf.if %15 {
      %c0_12 = arith.constant 0 : index
      %c0_13 = arith.constant 0 : index
      %16 = vector.load %arg7[%c0_12, %c0_13] : memref<8x512xf32, #tpu.memory_space<vmem>>, vector<8x512xf32>
      %17 = vector.shape_cast %16 : vector<8x512xf32> to vector<1x8x512xf32>
      %cst = arith.constant dense<0.000000e+00> : vector<1xf32>
      %18 = vector.multi_reduction <add>, %17, %cst [1, 2] : vector<1x8x512xf32> to vector<1xf32>
      %19 = vector.shape_cast %18 : vector<1xf32> to vector<1x1x1xf32>
      %20 = vector.extract %19[0, 0, 0] : f32 from vector<1x1x1xf32>
      %c0_14 = arith.constant 0 : index
      %c0_15 = arith.constant 0 : index
      %21 = vector.load %arg1[%c0_14, %c0_15] : memref<2x4xf32, #tpu.memory_space<vmem>>, vector<2x4xf32>
      %c0_16 = arith.constant 0 : index
      %c0_17 = arith.constant 0 : index
      %22 = vector.load %arg2[%c0_16, %c0_17] : memref<2x4xf32, #tpu.memory_space<vmem>>, vector<2x4xf32>
      %cst_18 = arith.constant 0.899999976 : f32
      %23 = vector.broadcast %cst_18 : f32 to vector<2x4xf32>
      %24 = arith.subf %23, %21 : vector<2x4xf32>
      %cst_19 = arith.constant 0.000000e+00 : f32
      %25 = vector.broadcast %cst_19 : f32 to vector<2x4xf32>
      %26 = arith.maximumf %24, %25 : vector<2x4xf32>
      %cst_20 = arith.constant 1.000000e-01 : f32
      %27 = vector.broadcast %cst_20 : f32 to vector<2x4xf32>
      %28 = arith.subf %21, %27 : vector<2x4xf32>
      %cst_21 = arith.constant 0.000000e+00 : f32
      %29 = vector.broadcast %cst_21 : f32 to vector<2x4xf32>
      %30 = arith.maximumf %28, %29 : vector<2x4xf32>
      %31 = arith.mulf %22, %26 : vector<2x4xf32>
      %32 = arith.mulf %31, %26 : vector<2x4xf32>
      %cst_22 = arith.constant 1.000000e+00 : f32
      %33 = vector.broadcast %cst_22 : f32 to vector<2x4xf32>
      %34 = arith.subf %33, %22 : vector<2x4xf32>
      %cst_23 = arith.constant 5.000000e-01 : f32
      %35 = vector.broadcast %cst_23 : f32 to vector<2x4xf32>
      %36 = arith.mulf %35, %34 : vector<2x4xf32>
      %37 = arith.mulf %36, %30 : vector<2x4xf32>
      %38 = arith.mulf %37, %30 : vector<2x4xf32>
      %39 = arith.addf %32, %38 : vector<2x4xf32>
      %40 = arith.mulf %21, %22 : vector<2x4xf32>
      %cst_24 = arith.constant 1.000000e+00 : f32
      %41 = vector.broadcast %cst_24 : f32 to vector<2x4xf32>
      %42 = arith.subf %41, %21 : vector<2x4xf32>
      %cst_25 = arith.constant 1.000000e+00 : f32
      %43 = vector.broadcast %cst_25 : f32 to vector<2x4xf32>
      %44 = arith.subf %43, %22 : vector<2x4xf32>
      %45 = arith.mulf %42, %44 : vector<2x4xf32>
      %46 = arith.addf %40, %45 : vector<2x4xf32>
      %cst_26 = arith.constant 1.000000e+00 : f32
      %47 = vector.broadcast %cst_26 : f32 to vector<2x4xf32>
      %48 = arith.subf %47, %46 : vector<2x4xf32>
      %49 = arith.mulf %48, %48 : vector<2x4xf32>
      %50 = arith.mulf %39, %49 : vector<2x4xf32>
      %51 = vector.shape_cast %50 : vector<2x4xf32> to vector<1x2x4xf32>
      %cst_27 = arith.constant dense<0.000000e+00> : vector<1xf32>
      %52 = vector.multi_reduction <add>, %51, %cst_27 [1, 2] : vector<1x2x4xf32> to vector<1xf32>
      %53 = vector.shape_cast %52 : vector<1xf32> to vector<1x1x1xf32>
      %54 = vector.extract %53[0, 0, 0] : f32 from vector<1x1x1xf32>
      %cst_28 = arith.constant 5.000000e-04 : f32
      %55 = arith.mulf %cst_28, %20 : f32
      %56 = arith.addf %54, %55 : f32
      %c0_29 = arith.constant 0 : index
      %c0_30 = arith.constant 0 : index
      %57 = memref.load %arg6[%c0_29, %c0_30] : memref<1x1xf32, #tpu.memory_space<smem>>
      memref.store %56, %arg6[%c0_29, %c0_30] : memref<1x1xf32, #tpu.memory_space<smem>>
    } else {
    }
    return
  }
  func.func @transform_0(%arg0: i32) -> (i32, i32) {
    %c0_i32 = arith.constant 0 : i32
    %c0_i32_0 = arith.constant 0 : i32
    %c0_i32_1 = arith.constant 0 : i32
    return %c0_i32, %c0_i32_0 : i32, i32
  }
  func.func @transform_1(%arg0: i32) -> (i32, i32) {
    %c0_i32 = arith.constant 0 : i32
    %c0_i32_0 = arith.constant 0 : i32
    %c0_i32_1 = arith.constant 0 : i32
    return %c0_i32, %c0_i32_0 : i32, i32
  }
  func.func @transform_2(%arg0: i32) -> (i32, i32) {
    %c0_i32 = arith.constant 0 : i32
    %c0_i32_0 = arith.constant 0 : i32
    return %arg0, %c0_i32 : i32, i32
  }
  func.func @transform_3(%arg0: i32) -> (i32, i32) {
    %c0_i32 = arith.constant 0 : i32
    %c0_i32_0 = arith.constant 0 : i32
    return %arg0, %c0_i32 : i32, i32
  }
  func.func @transform_4(%arg0: i32) -> (i32, i32) {
    %c0_i32 = arith.constant 0 : i32
    %c0_i32_0 = arith.constant 0 : i32
    return %arg0, %c0_i32 : i32, i32
  }
  func.func @transform_5(%arg0: i32) -> (i32, i32) {
    %c0_i32 = arith.constant 0 : i32
    %c0_i32_0 = arith.constant 0 : i32
    %c0_i32_1 = arith.constant 0 : i32
    return %c0_i32, %c0_i32_0 : i32, i32
  }
}

</mosaic_0001>

<llo_original>
// kernel: tpu_custom_call.1
$region0: #{tpu_custom_call.1}
  #allocation0 [shape = 'u32[]', space=smem, size = 0x4, offset = 0x4, fixed_abs, tag = 'smem constant byte address 0x4 - core index']
  #allocation1 [shape = 'u32[72,128]{1,0:T(1,128)}', space=vmem, size = 0x9000, scoped, tag = 'internal scratch']
  #allocation2 [shape = 'f32[8,512]{1,0:T(8,128)}', space=vmem, size = 0x4000, scoped, tag = 'scratch operand']
  %s0 = inlined_call_operand.hbm [shape: f32[2,4], index: 0, kind: input, shape index: {}]
  %s1 = inlined_call_operand.hbm [shape: f32[2,4], index: 1, kind: input, shape index: {}]
  %s2 = inlined_call_operand.hbm [shape: f32[8,512], index: 2, kind: input, shape index: {}]
  %s3 = inlined_call_operand.hbm [shape: f32[8,512], index: 3, kind: input, shape index: {}]
  %s4 = inlined_call_operand.hbm [shape: s8[8,512], index: 4, kind: input, shape index: {}]
  %s5 = inlined_call_operand.hbm [shape: f32[1,1], index: 5, kind: output, shape index: {}]
  %s6 = sld [smem:[#allocation0]]
  $region58: #{tpu_custom_call.1} parent=0
    _
  %s8 = ssub.s32 1, %s6
  %s9 = scalar_select 0, %s8, %s6
  $region1: #{tpu_custom_call.1} parent=0
    #allocation3 [shape = 'u8[1024]{0}', space=vmem, size = 0x400, scoped, tag = 'input window, operand 0, single buffered']
    #allocation4 [shape = 's32[1]{0}', space=sflag, size = 0x4, scoped, tag = 'scoped memory for tpu_custom_call.1']
    #allocation5 [shape = 's32[1]{0}', space=sflag, size = 0x4, scoped, tag = 'scoped memory for tpu_custom_call.1']
    #allocation6 [shape = 'u8[1024]{0}', space=vmem, size = 0x400, scoped, tag = 'input window, operand 1, single buffered']
    #allocation7 [shape = 's32[1]{0}', space=sflag, size = 0x4, scoped, tag = 'scoped memory for tpu_custom_call.1']
    #allocation8 [shape = 'u8[16384]{0}', space=vmem, size = 0x4000, scoped, tag = 'input window, operand 2, single buffered']
    #allocation9 [shape = 'u8[16384]{0}', space=vmem, size = 0x4000, scoped, tag = 'input window, operand 3, single buffered']
    #allocation10 [shape = 's32[1]{0}', space=sflag, size = 0x4, scoped, tag = 'scoped memory for tpu_custom_call.1']
    #allocation11 [shape = 'u8[4096]{0}', space=vmem, size = 0x1000, scoped, tag = 'input window, operand 4, single buffered']
    #allocation12 [shape = 'u8[512]{0}', space=smem, size = 0x200, scoped, tag = 'output window, operand 0, single buffered']
    %10 = vsyncpa [#allocation4], 0
    %11 = vsyncpa [#allocation7], 0
    %12 = vsyncpa [#allocation10], 0
    %13 = vsyncpa [#allocation5], 0
    // Predicated region
    $region2: #{tpu_custom_call.1} parent=1 // pred_check
      _
    $region3: #{tpu_custom_call.1} parent=1 // pred_check_branch
      %15 = sbr.rel (0) target = $region5
    $region4: #{tpu_custom_call.1} parent=1 // pred_region
      %17 = vsyncadd [#allocation4], 0
      %s19 = sshll.u32 %s0, 4
      %s20 = int_to_ptr.hbm [resolvable:$true] %s19
      %s21 = sshll.u32 [#allocation3], 4
      %s22 = int_to_ptr.vmem [resolvable:$true] %s21
      %24 = dma.hbm_to_vmem [thread:$0]  %s20, 32, %s22, [#allocation4]
    $region5: #{tpu_custom_call.1} parent=1 // pred_fallthru
      _
    // Predicated region
    $region6: #{tpu_custom_call.1} parent=1 // pred_check
      _
    $region7: #{tpu_custom_call.1} parent=1 // pred_check_branch
      %26 = sbr.rel (0) target = $region9
    $region8: #{tpu_custom_call.1} parent=1 // pred_region
      %28 = vsyncadd [#allocation7], 0
      %s30 = sshll.u32 %s1, 4
      %s31 = int_to_ptr.hbm [resolvable:$true] %s30
      %s32 = sshll.u32 [#allocation6], 4
      %s33 = int_to_ptr.vmem [resolvable:$true] %s32
      %35 = dma.hbm_to_vmem [thread:$0]  %s31, 32, %s33, [#allocation7]
    $region9: #{tpu_custom_call.1} parent=1 // pred_fallthru
      _
    // Predicated region
    $region10: #{tpu_custom_call.1} parent=1 // pred_check
      _
    $region11: #{tpu_custom_call.1} parent=1 // pred_check_branch
      %37 = sbr.rel (0) target = $region13
    $region12: #{tpu_custom_call.1} parent=1 // pred_region
      %39 = vsyncadd [#allocation7], 0
      %s41 = sshll.u32 %s2, 4
      %s42 = int_to_ptr.hbm [resolvable:$true] %s41
      %s43 = sshll.u32 [#allocation8], 4
      %s44 = int_to_ptr.vmem [resolvable:$true] %s43
      %46 = dma.hbm_to_vmem [thread:$0]  %s42, 512, %s44, [#allocation7]
    $region13: #{tpu_custom_call.1} parent=1 // pred_fallthru
      _
    // Predicated region
    $region14: #{tpu_custom_call.1} parent=1 // pred_check
      _
    $region15: #{tpu_custom_call.1} parent=1 // pred_check_branch
      %48 = sbr.rel (0) target = $region17
    $region16: #{tpu_custom_call.1} parent=1 // pred_region
      %50 = vsyncadd [#allocation10], 0
      %s52 = sshll.u32 %s3, 4
      %s53 = int_to_ptr.hbm [resolvable:$true] %s52
      %s54 = sshll.u32 [#allocation9], 4
      %s55 = int_to_ptr.vmem [resolvable:$true] %s54
      %57 = dma.hbm_to_vmem [thread:$0]  %s53, 512, %s55, [#allocation10]
    $region17: #{tpu_custom_call.1} parent=1 // pred_fallthru
      _
    // Predicated region
    $region18: #{tpu_custom_call.1} parent=1 // pred_check
      _
    $region19: #{tpu_custom_call.1} parent=1 // pred_check_branch
      %59 = sbr.rel (0) target = $region21
    $region20: #{tpu_custom_call.1} parent=1 // pred_region
      %61 = vsyncadd [#allocation10], 0
      %s63 = sshll.u32 %s4, 4
      %s64 = int_to_ptr.hbm [resolvable:$true] %s63
      %s65 = sshll.u32 [#allocation11], 4
      %s66 = int_to_ptr.vmem [resolvable:$true] %s65
      %68 = dma.hbm_to_vmem [thread:$0]  %s64, 128, %s66, [#allocation10]
    $region21: #{tpu_custom_call.1} parent=1 // pred_fallthru
      _
    // Predicated region
    $region22: #{tpu_custom_call.1} parent=1 // pred_check
      _
    $region23: #{tpu_custom_call.1} parent=1 // pred_check_branch
      %70 = sbr.rel (0) target = $region25
    $region24: #{tpu_custom_call.1} parent=1 // pred_region
      %72 = dma.done [#allocation4], 32
    $region25: #{tpu_custom_call.1} parent=1 // pred_fallthru
      _
    // Predicated region
    $region26: #{tpu_custom_call.1} parent=1 // pred_check
      _
    $region27: #{tpu_custom_call.1} parent=1 // pred_check_branch
      %74 = sbr.rel (0) target = $region29
    $region28: #{tpu_custom_call.1} parent=1 // pred_region
      %76 = dma.done [#allocation7], 32
    $region29: #{tpu_custom_call.1} parent=1 // pred_fallthru
      _
    // Predicated region
    $region30: #{tpu_custom_call.1} parent=1 // pred_check
      _
    $region31: #{tpu_custom_call.1} parent=1 // pred_check_branch
      %78 = sbr.rel (0) target = $region33
    $region32: #{tpu_custom_call.1} parent=1 // pred_region
      %80 = dma.done [#allocation7], 512
    $region33: #{tpu_custom_call.1} parent=1 // pred_fallthru
      _
    // Predicated region
    $region34: #{tpu_custom_call.1} parent=1 // pred_check
      _
    $region35: #{tpu_custom_call.1} parent=1 // pred_check_branch
      %82 = sbr.rel (0) target = $region37
    $region36: #{tpu_custom_call.1} parent=1 // pred_region
      %84 = dma.done [#allocation10], 512
    $region37: #{tpu_custom_call.1} parent=1 // pred_fallthru
      _
    // Predicated region
    $region38: #{tpu_custom_call.1} parent=1 // pred_check
      _
    $region39: #{tpu_custom_call.1} parent=1 // pred_check_branch
      %86 = sbr.rel (0) target = $region41
    $region40: #{tpu_custom_call.1} parent=1 // pred_region
      %88 = dma.done [#allocation10], 128
    $region41: #{tpu_custom_call.1} parent=1 // pred_fallthru
      _
    %p89 = scmp.eq.s32.totalorder 0, 0
    // Predicated region
    $region42: #{tpu_custom_call.1} parent=1 // pred_check
      %p90 = pneg %p89
    $region43: #{tpu_custom_call.1} parent=1 // pred_check_branch
      %92 = sbr.rel (%p90) target = $region45
    $region44: #{tpu_custom_call.1} parent=1 // pred_region
      %93 = vst [vmem:[#allocation2] sm:$0xff] 0.0
      %94 = vst [vmem:[#allocation2 + $0x8] sm:$0xff] 0.0
      %95 = vst [vmem:[#allocation2 + $0x10] sm:$0xff] 0.0
      %96 = vst [vmem:[#allocation2 + $0x18] sm:$0xff] 0.0
    $region45: #{tpu_custom_call.1} parent=1 // pred_fallthru
      _
    %v97 = vld [vmem:[#allocation9] sm:$0xff]
    %v98 = vld [vmem:[#allocation9 + $0x8] sm:$0xff]
    %v99 = vld [vmem:[#allocation9 + $0x10] sm:$0xff]
    %v100 = vld [vmem:[#allocation9 + $0x18] sm:$0xff]
    %v101 = vld [vmem:[#allocation8] sm:$0xff]
    %v102 = vld [vmem:[#allocation8 + $0x8] sm:$0xff]
    %v103 = vld [vmem:[#allocation8 + $0x10] sm:$0xff]
    %v104 = vld [vmem:[#allocation8 + $0x18] sm:$0xff]
    %v105 = vld [vmem:[#allocation11] sm:$0xff]
    %v106 = vunpack.c.0.s8 %v105
    %v107 = vunpack.c.1.s8 %v105
    %v108 = vunpack.c.2.s8 %v105
    %v109 = vunpack.c.3.s8 %v105
    %v110 = vcvt.s32.f32 %v106
    %v111 = vcvt.s32.f32 %v107
    %v112 = vcvt.s32.f32 %v108
    %v113 = vcvt.s32.f32 %v109
    %v114 = vmul.f32 %v101, %v110
    %v115 = vmul.f32 %v102, %v111
    %v116 = vmul.f32 %v103, %v112
    %v117 = vmul.f32 %v104, %v113
    %v118 = vsub.f32 %v97, %v114
    %v119 = vsub.f32 %v98, %v115
    %v120 = vsub.f32 %v99, %v116
    %v121 = vsub.f32 %v100, %v117
    %v122 = vmul.f32 %v118, %v118
    %v123 = vmul.f32 %v119, %v119
    %v124 = vmul.f32 %v120, %v120
    %v125 = vmul.f32 %v121, %v121
    %v126 = vld [vmem:[#allocation2] sm:$0xff]
    %v127 = vld [vmem:[#allocation2 + $0x8] sm:$0xff]
    %v128 = vld [vmem:[#allocation2 + $0x10] sm:$0xff]
    %v129 = vld [vmem:[#allocation2 + $0x18] sm:$0xff]
    %v130 = vadd.f32 %v126, %v122
    %v131 = vadd.f32 %v127, %v123
    %v132 = vadd.f32 %v128, %v124
    %v133 = vadd.f32 %v129, %v125
    %134 = vst [vmem:[#allocation2] sm:$0xff] %v130
    %135 = vst [vmem:[#allocation2 + $0x8] sm:$0xff] %v131
    %136 = vst [vmem:[#allocation2 + $0x10] sm:$0xff] %v132
    %137 = vst [vmem:[#allocation2 + $0x18] sm:$0xff] %v133
    // Predicated region
    $region46: #{tpu_custom_call.1} parent=1 // pred_check
      %p138 = pneg %p89
    $region47: #{tpu_custom_call.1} parent=1 // pred_check_branch
      %140 = sbr.rel (%p138) target = $region49
    $region48: #{tpu_custom_call.1} parent=1 // pred_region
      %v141 = vld [vmem:[#allocation2] sm:$0xff]
      %v142 = vld [vmem:[#allocation2 + $0x8] sm:$0xff]
      %v143 = vld [vmem:[#allocation2 + $0x10] sm:$0xff]
      %v144 = vld [vmem:[#allocation2 + $0x18] sm:$0xff]
      %v145 = vadd.f32 %v141, %v142
      %v146 = vadd.f32 %v145, %v143
      %v147 = vadd.f32 %v146, %v144
      %148 = vadd.xlane.f32.xlu0 %v147
      %v149 = vpop.xlane.xlu0 %148
      %v150 = vrot.slane %v149, 4
      %v151 = vadd.f32 %v149, %v150
      %v152 = vrot.slane %v151, 2
      %v153 = vadd.f32 %v151, %v152
      %v154 = vrot.slane %v153, 1
      %v155 = vadd.f32 %v153, %v154
      %s156 = vtos %v155
      %v157 = vld [vmem:[#allocation3] sm:$0x3]
      %v158 = vld [vmem:[#allocation6] sm:$0x3]
      %v159 = vsub.f32 0.9, %v157
      %v160 = vmax.f32 %v159, 0.0
      %v161 = vsub.f32 %v157, 0.1
      %v162 = vmax.f32 %v161, 0.0
      %v163 = vmul.f32 %v158, %v160
      %v164 = vmul.f32 %v163, %v160
      %v165 = vsub.f32 1.0, %v158
      %v166 = vmul.f32 %v165, 0.5
      %v167 = vmul.f32 %v166, %v162
      %v168 = vmul.f32 %v167, %v162
      %v169 = vadd.f32 %v164, %v168
      %v170 = vmul.f32 %v157, %v158
      %v171 = vsub.f32 1.0, %v157
      %v172 = vmul.f32 %v171, %v165
      %v173 = vadd.f32 %v170, %v172
      %v174 = vsub.f32 1.0, %v173
      %v175 = vmul.f32 %v174, %v174
      %v176 = vmul.f32 %v169, %v175
      %vm177 = vcmask 25600
      %v178 = vsel %vm177, %v176, 0.0
      %179 = vadd.xlane.f32.xlu0 %v178
      %v180 = vpop.xlane.xlu0 %179
      %v181 = vrot.slane %v180, 4
      %v182 = vadd.f32 %v180, %v181
      %v183 = vrot.slane %v182, 2
      %v184 = vadd.f32 %v182, %v183
      %v185 = vrot.slane %v184, 1
      %v186 = vadd.f32 %v184, %v185
      %s187 = vtos %v186
      %s188 = smul.f32 %s156, 0.0005
      %s189 = sadd.f32 %s187, %s188
      %s190 = scalar_lea.smem [#allocation12], 0
      %191 = sst [smem:[%s190]] %s189
    $region49: #{tpu_custom_call.1} parent=1 // pred_fallthru
      _
    // Predicated region
    $region50: #{tpu_custom_call.1} parent=1 // pred_check
      _
    $region51: #{tpu_custom_call.1} parent=1 // pred_check_branch
      %193 = sbr.rel (0) target = $region53
    $region52: #{tpu_custom_call.1} parent=1 // pred_region
      %195 = vsyncadd [#allocation5], 0
      %s197 = sshll.u32 %s5, 4
      %s198 = int_to_ptr.hbm [resolvable:$true] %s197
      %200 = dma.smem_to_hbm [#allocation12], 16, %s198, [#allocation5]
    $region53: #{tpu_custom_call.1} parent=1 // pred_fallthru
      _
    // Predicated region
    $region54: #{tpu_custom_call.1} parent=1 // pred_check
      _
    $region55: #{tpu_custom_call.1} parent=1 // pred_check_branch
      %202 = sbr.rel (0) target = $region57
    $region56: #{tpu_custom_call.1} parent=1 // pred_region
      %204 = dma.done [#allocation5], 16
    $region57: #{tpu_custom_call.1} parent=1 // pred_fallthru
      _
    %205 = sfence
    %206 = vsyncpa [#allocation4], 1
    %207 = vsyncpa [#allocation7], 1
    %208 = vsyncpa [#allocation10], 1
    %209 = vsyncpa [#allocation5], 1

</llo_original>
